<compile_context>
chip_gen: v7x
topology: tpu7x:2x2x1
jax: 0.10.0
libtpu: 0.0.40
codegen_flags: <defaults>
</compile_context>

<pallas_src>
import functools

import jax
import jax.numpy as jnp
from jax.experimental import pallas as pl
from jax.experimental.pallas import tpu as pltpu


def _complex_conv1d_kernel(x_ref, w_ref, b_ref, o_ref, *, batch, seq_len, l_out):
    # x_ref: (2*C_in, B*L)          packed activations, batch folded on lanes
    # w_ref: (2*C_out, K*2*C_in)    packed complex weight, taps in contraction
    # b_ref: (2*C_out, 1)           packed bias (b_re - b_im ; b_re + b_im), f32
    # o_ref: (2*C_out, N_pad)       packed output, lane-dense (N_pad % 128 == 0)
    c2_in = x_ref.shape[0]
    k_taps = w_ref.shape[1] // c2_in
    n_pad = o_ref.shape[1]

    x = x_ref[...]                                            # (2*C_in, B*L)

    # In-kernel im2col: rows ordered tap-major (matching w_cat column order),
    # columns ordered batch-major then output position.  All slices are static.
    taps = []
    for k in range(k_taps):
        cols = [x[:, b * seq_len + k: b * seq_len + k + l_out]
                for b in range(batch)]
        taps.append(cols[0] if batch == 1 else jnp.concatenate(cols, axis=1))
    x_cat = taps[0] if k_taps == 1 else jnp.concatenate(taps, axis=0)
    # (K*2*C_in, B*L_out)

    # Pad lanes with zeros so the output store is unmasked / lane-dense.
    pad = n_pad - batch * l_out
    if pad > 0:
        x_cat = jnp.concatenate(
            [x_cat, jnp.zeros((x_cat.shape[0], pad), dtype=x_cat.dtype)], axis=1)

    acc = jnp.dot(w_ref[...], x_cat,
                  preferred_element_type=jnp.float32,
                  precision=jax.lax.Precision.HIGHEST)        # (2*C_out, N_pad) f32
    o_ref[...] = (acc + b_ref[...]).astype(o_ref.dtype)


def complex_conv1d_pallas(x, w_re, w_im, b_re, b_im, *,
                          compute_dtype=jnp.bfloat16):
    """x: [B, C_in, L, 2] (PyTorch layout). Weights: [C_out, C_in, K]. Bias: [C_out].
    Returns [B, C_out, L_out, 2] (float32). stride=1, padding=0, dilation=1, groups=1."""
    B, C_in, L, _ = x.shape
    C_out, _, K = w_re.shape
    L_out = L - K + 1
    n_cols = B * L_out
    n_pad = pl.cdiv(n_cols, 128) * 128          # lane-dense output width

    # ---- pack activations: [2*C_in, B*L]; real channels then imag channels,
    #      batch folded onto the lane axis (batch-major). -------------------------
    xp = jnp.concatenate([x[..., 0], x[..., 1]], axis=1)       # [B, 2*C_in, L]
    xp = jnp.transpose(xp, (1, 0, 2)).reshape(2 * C_in, B * L).astype(compute_dtype)

    # ---- pack weights: per tap M_k = [[Wre_k, -Wim_k], [Wim_k, Wre_k]];
    #      columns grouped tap-major to match the in-kernel im2col row order. ----
    wre_k = jnp.transpose(w_re, (2, 0, 1))                     # [K, C_out, C_in]
    wim_k = jnp.transpose(w_im, (2, 0, 1))                     # [K, C_out, C_in]
    m_k = jnp.concatenate(
        [jnp.concatenate([wre_k, -wim_k], axis=2),
         jnp.concatenate([wim_k, wre_k], axis=2)],
        axis=1)                                                # [K, 2*C_out, 2*C_in]
    w_cat = jnp.transpose(m_k, (1, 0, 2)).reshape(2 * C_out, 2 * K * C_in)
    w_cat = w_cat.astype(compute_dtype)

    # ---- pack bias: real rows get (b_re - b_im), imag rows get (b_re + b_im) ----
    b_cat = jnp.concatenate([b_re - b_im, b_re + b_im]).reshape(2 * C_out, 1)
    b_cat = b_cat.astype(jnp.float32)

    kernel = functools.partial(_complex_conv1d_kernel,
                               batch=B, seq_len=L, l_out=L_out)

    itm = jnp.dtype(compute_dtype).itemsize
    flops = 2 * (2 * C_out) * (K * 2 * C_in) * n_cols
    bytes_accessed = (xp.size * itm + w_cat.size * itm
                      + b_cat.size * 4 + (2 * C_out) * n_pad * 4)

    out = pl.pallas_call(
        kernel,
        out_shape=jax.ShapeDtypeStruct((2 * C_out, n_pad), jnp.float32),
        grid=(1,),                                 # B folded into lanes: one step
        in_specs=[
            pl.BlockSpec((2 * C_in, B * L), lambda i: (0, 0)),            # xp
            pl.BlockSpec((2 * C_out, 2 * K * C_in), lambda i: (0, 0)),    # w_cat
            pl.BlockSpec((2 * C_out, 1), lambda i: (0, 0)),               # b_cat
        ],
        out_specs=pl.BlockSpec((2 * C_out, n_pad), lambda i: (0, 0)),
        compiler_params=pltpu.CompilerParams(
            dimension_semantics=("arbitrary",)),
        cost_estimate=pl.CostEstimate(flops=flops, transcendentals=0,
                                      bytes_accessed=bytes_accessed),
    )(xp, w_cat, b_cat)

    # [2*C_out, N_pad] -> [B, C_out, L_out, 2] (PyTorch layout).  Downstream
    # consumers able to take [2, C_out, B, L_out] could skip this transpose.
    out = out[:, :n_cols].reshape(2, C_out, B, L_out)
    return jnp.transpose(out, (2, 1, 3, 0))


def _reference(x, w_re, w_im, b_re, b_im):
    """Plain-JAX reference using lax.conv_general_dilated (NCW), full precision."""
    def conv(inp, w, b):
        y = jax.lax.conv_general_dilated(
            inp, w, window_strides=(1,), padding="VALID",
            dimension_numbers=("NCH", "OIH", "NCH"),
            precision=jax.lax.Precision.HIGHEST)
        return y + b[None, :, None]
    xr, xi = x[..., 0], x[..., 1]
    real = conv(xr, w_re, b_re) - conv(xi, w_im, b_im)
    imag = conv(xi, w_re, b_re) + conv(xr, w_im, b_im)
    return jnp.stack((real, imag), axis=-1)


if __name__ == "__main__":
    # Module config: ComplexConv1d(in_channel=4, out_channel=8, kernel_size=3)
    B, C_in, C_out, L, K = 2, 4, 8, 16, 3

    key = jax.random.PRNGKey(0)
    kx, kwr, kwi, kbr, kbi = jax.random.split(key, 5)

    x = jax.random.normal(kx, (B, C_in, L, 2), dtype=jnp.float32)

    # Deterministic init mimicking PyTorch Conv1d default (uniform +/- 1/sqrt(fan_in)).
    bound = 1.0 / (C_in * K) ** 0.5
    w_re = jax.random.uniform(kwr, (C_out, C_in, K), jnp.float32, -bound, bound)
    w_im = jax.random.uniform(kwi, (C_out, C_in, K), jnp.float32, -bound, bound)
    b_re = jax.random.uniform(kbr, (C_out,), jnp.float32, -bound, bound)
    b_im = jax.random.uniform(kbi, (C_out,), jnp.float32, -bound, bound)

    ref = _reference(x, w_re, w_im, b_re, b_im)

    # ---- f32 path: HIGHEST-precision MXU matmul, tight tolerance ----------------
    out_f32 = jax.block_until_ready(
        complex_conv1d_pallas(x, w_re, w_im, b_re, b_im,
                              compute_dtype=jnp.float32))
    assert out_f32.shape == (B, C_out, L - K + 1, 2), out_f32.shape
    assert jnp.allclose(out_f32, ref, atol=1e-4, rtol=1e-4), "f32 mismatch vs reference"

    # ---- bf16 path (default): compare against reference fed bf16-rounded inputs;
    #      both accumulate in f32, so tolerance stays tight. ----------------------
    def _bf(a):
        return a.astype(jnp.bfloat16).astype(jnp.float32)
    ref_bf16 = _reference(_bf(x), _bf(w_re), _bf(w_im), b_re, b_im)
    out_bf16 = jax.block_until_ready(
        complex_conv1d_pallas(x, w_re, w_im, b_re, b_im,
                              compute_dtype=jnp.bfloat16))
    assert out_bf16.shape == (B, C_out, L - K + 1, 2), out_bf16.shape
    assert jnp.allclose(out_bf16, ref_bf16, atol=2e-3, rtol=2e-3), \
        "bf16 mismatch vs reference"

    print("KERNEL_OK")
</pallas_src>

<mosaic_0001>
module attributes {stable_mosaic.version = 11 : i64} {
  func.func @_complex_conv1d_kernel(%arg0: i32, %arg1: memref<8x32xf32, #tpu.memory_space<vmem>>, %arg2: memref<16x24xf32, #tpu.memory_space<vmem>>, %arg3: memref<16x1xf32, #tpu.memory_space<vmem>>, %arg4: memref<16x128xf32, #tpu.memory_space<vmem>>) attributes {dimension_semantics = [#tpu.dimension_semantics<arbitrary>], iteration_bounds = array<i64: 1>, scalar_prefetch = 0 : i64, scratch_operands = 0 : i64, tpu.core_type = #tpu.core_type<tc>, window_params = [{pipeline_mode = #tpu.pipeline_mode<synchronous>, transform_indices = @transform_0, window_bounds = array<i64: 8, 32>}, {pipeline_mode = #tpu.pipeline_mode<synchronous>, transform_indices = @transform_1, window_bounds = array<i64: 16, 24>}, {pipeline_mode = #tpu.pipeline_mode<synchronous>, transform_indices = @transform_2, window_bounds = array<i64: 16, 1>}, {pipeline_mode = #tpu.pipeline_mode<synchronous>, transform_indices = @transform_3, window_bounds = array<i64: 16, 128>}]} {
    %c0 = arith.constant 0 : index
    %c0_0 = arith.constant 0 : index
    %0 = vector.load %arg1[%c0, %c0_0] : memref<8x32xf32, #tpu.memory_space<vmem>>, vector<8x32xf32>
    %1 = vector.extract_strided_slice %0 {offsets = [0, 0], sizes = [8, 14], strides = [1, 1]} : vector<8x32xf32> to vector<8x14xf32>
    %2 = vector.extract_strided_slice %0 {offsets = [0, 16], sizes = [8, 14], strides = [1, 1]} : vector<8x32xf32> to vector<8x14xf32>
    %3 = tpu.concatenate %1, %2 in 1 : vector<8x14xf32>, vector<8x14xf32> -> vector<8x28xf32>
    %4 = vector.extract_strided_slice %0 {offsets = [0, 1], sizes = [8, 14], strides = [1, 1]} : vector<8x32xf32> to vector<8x14xf32>
    %5 = vector.extract_strided_slice %0 {offsets = [0, 17], sizes = [8, 14], strides = [1, 1]} : vector<8x32xf32> to vector<8x14xf32>
    %6 = tpu.concatenate %4, %5 in 1 : vector<8x14xf32>, vector<8x14xf32> -> vector<8x28xf32>
    %7 = vector.extract_strided_slice %0 {offsets = [0, 2], sizes = [8, 14], strides = [1, 1]} : vector<8x32xf32> to vector<8x14xf32>
    %8 = vector.extract_strided_slice %0 {offsets = [0, 18], sizes = [8, 14], strides = [1, 1]} : vector<8x32xf32> to vector<8x14xf32>
    %9 = tpu.concatenate %7, %8 in 1 : vector<8x14xf32>, vector<8x14xf32> -> vector<8x28xf32>
    %10 = tpu.concatenate %3, %6, %9 in 0 : vector<8x28xf32>, vector<8x28xf32>, vector<8x28xf32> -> vector<24x28xf32>
    %cst = arith.constant 0.000000e+00 : f32
    %11 = vector.broadcast %cst : f32 to vector<24x100xf32>
    %12 = tpu.concatenate %10, %11 in 1 : vector<24x28xf32>, vector<24x100xf32> -> vector<24x128xf32>
    %c0_1 = arith.constant 0 : index
    %c0_2 = arith.constant 0 : index
    %13 = vector.load %arg2[%c0_1, %c0_2] : memref<16x24xf32, #tpu.memory_space<vmem>>, vector<16x24xf32>
    %cst_3 = arith.constant dense<0.000000e+00> : vector<16x128xf32>
    %14 = tpu.matmul %13, %12, %cst_3 {dimension_numbers = #tpu.dot_dimension_numbers<[1], [0], [0], [1], [0, 0, 1, 1], [], []>, precision = #tpu.contract_precision<fp32>} : vector<16x24xf32>, vector<24x128xf32>, vector<16x128xf32> -> vector<16x128xf32>
    %c0_4 = arith.constant 0 : index
    %c0_5 = arith.constant 0 : index
    %15 = vector.load %arg3[%c0_4, %c0_5] : memref<16x1xf32, #tpu.memory_space<vmem>>, vector<16x1xf32>
    %16 = vector.broadcast %15 : vector<16x1xf32> to vector<16x128xf32>
    %17 = arith.addf %14, %16 : vector<16x128xf32>
    %c0_6 = arith.constant 0 : index
    %c0_7 = arith.constant 0 : index
    %18 = vector.load %arg4[%c0_6, %c0_7] : memref<16x128xf32, #tpu.memory_space<vmem>>, vector<16x128xf32>
    tpu.vector_store %arg4[%c0_6, %c0_7], %17 {strides = array<i32>} : memref<16x128xf32, #tpu.memory_space<vmem>>, vector<16x128xf32>,
    return
  }
  func.func @transform_0(%arg0: i32) -> (i32, i32) {
    %c0_i32 = arith.constant 0 : i32
    %c0_i32_0 = arith.constant 0 : i32
    %c0_i32_1 = arith.constant 0 : i32
    return %c0_i32, %c0_i32_0 : i32, i32
  }
  func.func @transform_1(%arg0: i32) -> (i32, i32) {
    %c0_i32 = arith.constant 0 : i32
    %c0_i32_0 = arith.constant 0 : i32
    %c0_i32_1 = arith.constant 0 : i32
    return %c0_i32, %c0_i32_0 : i32, i32
  }
  func.func @transform_2(%arg0: i32) -> (i32, i32) {
    %c0_i32 = arith.constant 0 : i32
    %c0_i32_0 = arith.constant 0 : i32
    %c0_i32_1 = arith.constant 0 : i32
    return %c0_i32, %c0_i32_0 : i32, i32
  }
  func.func @transform_3(%arg0: i32) -> (i32, i32) {
    %c0_i32 = arith.constant 0 : i32
    %c0_i32_0 = arith.constant 0 : i32
    %c0_i32_1 = arith.constant 0 : i32
    return %c0_i32, %c0_i32_0 : i32, i32
  }
}

</mosaic_0001>

<llo_original>
// kernel: tpu_custom_call.1
$region0: #{tpu_custom_call.1}
  #allocation0 [shape = 'u32[]', space=smem, size = 0x4, offset = 0x4, fixed_abs, tag = 'smem constant byte address 0x4 - core index']
  #allocation1 [shape = 'u32[144,128]{1,0:T(1,128)}', space=vmem, size = 0x12000, scoped, tag = 'internal scratch']
  %s0 = inlined_call_operand.hbm [shape: f32[8,32], index: 0, kind: input, shape index: {}]
  %s1 = inlined_call_operand.vmem [shape: f32[16,24], index: 1, kind: input, shape index: {}]
  %s2 = inlined_call_operand.vmem [shape: f32[16,1], index: 2, kind: input, shape index: {}]
  %s3 = inlined_call_operand.hbm [shape: f32[16,128], index: 3, kind: output, shape index: {}]
  %s4 = sld [smem:[#allocation0]]
  $region26: #{tpu_custom_call.1} parent=0
    _
  %s6 = ssub.s32 1, %s4
  %s7 = scalar_select 0, %s6, %s4
  $region1: #{tpu_custom_call.1} parent=0
    #allocation2 [shape = 'u8[4096]{0}', space=vmem, size = 0x1000, scoped, tag = 'input window, operand 0, single buffered']
    #allocation3 [shape = 's32[1]{0}', space=sflag, size = 0x4, scoped, tag = 'scoped memory for tpu_custom_call.1']
    #allocation4 [shape = 's32[1]{0}', space=sflag, size = 0x4, scoped, tag = 'scoped memory for tpu_custom_call.1']
    #allocation5 [shape = 'u8[8192]{0}', space=vmem, size = 0x2000, scoped, tag = 'output window, operand 0, single buffered']
    %8 = vsyncpa [#allocation3], 0
    %9 = vsyncpa [#allocation4], 0
    // Predicated region
    $region2: #{tpu_custom_call.1} parent=1 // pred_check
      _
    $region3: #{tpu_custom_call.1} parent=1 // pred_check_branch
      %11 = sbr.rel (0) target = $region5
    $region4: #{tpu_custom_call.1} parent=1 // pred_region
      %s13 = ssub.s32 128, 128
      %14 = vsyncadd [#allocation3], %s13
      %s16 = sshll.u32 [#allocation2], 4
      %s17 = int_to_ptr.vmem [resolvable:$true] %s16
      %19 = dma.hbm_to_vmem [thread:$0]  %s0, 128, %s17, [#allocation3]
    $region5: #{tpu_custom_call.1} parent=1 // pred_fallthru
      _
    // Predicated region
    $region6: #{tpu_custom_call.1} parent=1 // pred_check
      _
    $region7: #{tpu_custom_call.1} parent=1 // pred_check_branch
      %21 = sbr.rel (0) target = $region9
    $region8: #{tpu_custom_call.1} parent=1 // pred_region
      _
    $region9: #{tpu_custom_call.1} parent=1 // pred_fallthru
      _
    // Predicated region
    $region10: #{tpu_custom_call.1} parent=1 // pred_check
      _
    $region11: #{tpu_custom_call.1} parent=1 // pred_check_branch
      %23 = sbr.rel (0) target = $region13
    $region12: #{tpu_custom_call.1} parent=1 // pred_region
      _
    $region13: #{tpu_custom_call.1} parent=1 // pred_fallthru
      _
    // Predicated region
    $region14: #{tpu_custom_call.1} parent=1 // pred_check
      _
    $region15: #{tpu_custom_call.1} parent=1 // pred_check_branch
      %25 = sbr.rel (0) target = $region17
    $region16: #{tpu_custom_call.1} parent=1 // pred_region
      %26 = dma.done [#allocation3], 128
    $region17: #{tpu_custom_call.1} parent=1 // pred_fallthru
      _
    %v27 = vld [vmem:[#allocation2] sm:$0xff]
    %29 = vrot.lane.b32.xlu0 %v27, 126
    %v30 = vpop.permute.xlu0 %29
    %vm32 = vcmask 113664
    %v33 = vsel %vm32, %v27, %v30
    %34 = vrot.lane.b32.xlu0 %v27, 127
    %v35 = vpop.permute.xlu0 %34
    %37 = vrot.lane.b32.xlu0 %v27, 125
    %v38 = vpop.permute.xlu0 %37
    %v40 = vsel %vm32, %v35, %v38
    %41 = vrot.lane.b32.xlu0 %v27, 124
    %v42 = vpop.permute.xlu0 %41
    %v44 = vsel %vm32, %v30, %v42
    %vm45 = vcmask 228352
    %v46 = vsel %vm45, %v33, 0.0
    %v47 = vsel %vm45, %v40, 0.0
    %v48 = vsel %vm45, %v44, 0.0
    %v49 = vld [vmem:[%s1] sm:$0xff]
    %v50 = vld [vmem:[%s1 + $0x8] sm:$0xff]
    %v51 = vld [vmem:[%s2] sm:$0xff]
    %v52 = vld [vmem:[%s2 + $0x8] sm:$0xff]
    %54 = vset.pattern.permute.xlu0 0
    %55 = vperm.xlu0 %54, %v51
    %v56 = vpop.permute.xlu0 %55
    %59 = vset.pattern.permute.xlu0 0
    %60 = vperm.xlu0 %59, %v52
    %v61 = vpop.permute.xlu0 %60
    %vm63 = vcmask 195584
    %v65 = vsel %vm63, %v49, 0
    %v68 = vsel %vm63, %v50, 0
    %70 = vmatprep.subr.mxu0 0.0
    %v71 = vand.u32 %v46, 4294901760
    %72 = vmatpush1.msra.mxu0 %v71
    %73 = vmatprep.subr.mxu0 0.0
    %v74 = vand.u32 %v47, 4294901760
    %75 = vmatpush1.msra.mxu0 %v74
    %76 = vmatprep.subr.mxu0 0.0
    %v77 = vand.u32 %v48, 4294901760
    %78 = vmatpush1.msra.mxu0 %v77
    %79 = vmatprep.subr.mxu0 0.0
    %80 = vmatpush1.msra.mxu0 0.0
    %81 = vmatprep.subr.mxu0 0.0
    %82 = vmatpush1.msra.mxu0 0.0
    %83 = vmatprep.subr.mxu0 0.0
    %84 = vmatpush1.msra.mxu0 0.0
    %85 = vmatprep.subr.mxu0 0.0
    %86 = vmatpush1.msra.mxu0 0.0
    %87 = vmatprep.subr.mxu0 0.0
    %88 = vmatpush1.msra.mxu0 0.0
    %89 = vmatprep.subr.mxu0 0.0
    %90 = vmatpush1.msra.mxu0 0.0
    %91 = vmatprep.subr.mxu0 0.0
    %92 = vmatpush1.msra.mxu0 0.0
    %93 = vmatprep.subr.mxu0 0.0
    %94 = vmatpush1.msra.mxu0 0.0
    %95 = vmatprep.subr.mxu0 0.0
    %96 = vmatpush1.msra.mxu0 0.0
    %97 = vmatprep.subr.mxu0 0.0
    %98 = vmatpush1.msra.mxu0 0.0
    %99 = vmatprep.subr.mxu0 0.0
    %100 = vmatpush1.msra.mxu0 0.0
    %101 = vmatprep.subr.mxu0 0.0
    %102 = vmatpush1.msra.mxu0 0.0
    %103 = vmatprep.subr.mxu0 0.0
    %104 = vmatpush1.msra.mxu0 0.0
    %105 = vmatprep.subr.mxu0 0.0
    %106 = vmatpush1.msra.mxu0 0.0
    %107 = vmatprep.subr.mxu0 0.0
    %108 = vmatpush1.msra.mxu0 0.0
    %109 = vmatprep.subr.mxu0 0.0
    %110 = vmatpush1.msra.mxu0 0.0
    %111 = vmatprep.subr.mxu0 0.0
    %112 = vmatpush1.msra.mxu0 0.0
    %113 = vmatprep.subr.mxu0 0.0
    %114 = vmatpush1.msra.mxu0 0.0
    %115 = vmatprep.subr.mxu0 0.0
    %116 = vmatpush1.msra.mxu0 0.0
    %117 = vmatprep.subr.mxu0 0.0
    %118 = vmatpush1.msra.mxu0 0.0
    %119 = vmatprep.subr.mxu0 0.0
    %120 = vmatpush1.msra.mxu0 0.0
    %121 = vmatprep.subr.mxu0 0.0
    %122 = vmatpush1.msra.mxu0 0.0
    %123 = vmatprep.subr.mxu0 0.0
    %124 = vmatpush1.msra.mxu0 0.0
    %125 = vmatprep.subr.mxu0 0.0
    %126 = vmatpush1.msra.mxu0 0.0
    %127 = vmatprep.subr.mxu0 0.0
    %128 = vmatpush1.msra.mxu0 0.0
    %129 = vmatprep.subr.mxu0 0.0
    %130 = vmatpush1.msra.mxu0 0.0
    %131 = vmatprep.subr.mxu0 0.0
    %132 = vmatpush1.msra.mxu0 0.0
    %133 = vmatprep.subr.mxu0 0.0
    %134 = vmatpush1.msra.mxu0 0.0
    %135 = vmatprep.subr.mxu0 0.0
    %136 = vmatpush1.msra.mxu0 0.0
    %137 = vmatprep.mubr.f32.mxu0 0.0
    %v138 = vand.u32 %v65, 4294901760
    %v139 = vsub.f32 %v65, %v138
    %v140 = vand.u32 %v139, 4294901760
    %v141 = vsub.f32 %v139, %v140
    %v142 = vand.u32 %v141, 4294901760
    %143 = vmatmul.mubr.f32.gmra.mrb[0].mxu0 %v142
    %v144 = vpop.f32.mrb[0].mxu0
    %v145 = vadd.f32 %v56, %v144
    %v146 = vpop.f32.mrb[0].mxu0
    %147 = vmatprep.mubr.f32.mxu0 0.0
    %v148 = vand.u32 %v68, 4294901760
    %v149 = vsub.f32 %v68, %v148
    %v150 = vand.u32 %v149, 4294901760
    %v151 = vsub.f32 %v149, %v150
    %v152 = vand.u32 %v151, 4294901760
    %153 = vmatmul.mubr.f32.gmra.mrb[0].mxu0 %v152
    %v154 = vpop.f32.mrb[0].mxu0
    %v155 = vadd.f32 %v61, %v154
    %v156 = vpop.f32.mrb[0].mxu0
    %157 = vdwg.mxu0
    %158 = vmatprep.subr.mxu0 0.0
    %v159 = vand.u32 %v46, 4294901760
    %v160 = vsub.f32 %v46, %v159
    %v161 = vand.u32 %v160, 4294901760
    %v162 = vsub.f32 %v160, %v161
    %v163 = vand.u32 %v162, 4294901760
    %164 = vmatpush1.msra.mxu0 %v163
    %165 = vmatprep.subr.mxu0 0.0
    %v166 = vand.u32 %v47, 4294901760
    %v167 = vsub.f32 %v47, %v166
    %v168 = vand.u32 %v167, 4294901760
    %v169 = vsub.f32 %v167, %v168
    %v170 = vand.u32 %v169, 4294901760
    %171 = vmatpush1.msra.mxu0 %v170
    %172 = vmatprep.subr.mxu0 0.0
    %v173 = vand.u32 %v48, 4294901760
    %v174 = vsub.f32 %v48, %v173
    %v175 = vand.u32 %v174, 4294901760
    %v176 = vsub.f32 %v174, %v175
    %v177 = vand.u32 %v176, 4294901760
    %178 = vmatpush1.msra.mxu0 %v177
    %179 = vmatprep.subr.mxu0 0.0
    %180 = vmatpush1.msra.mxu0 0.0
    %181 = vmatprep.subr.mxu0 0.0
    %182 = vmatpush1.msra.mxu0 0.0
    %183 = vmatprep.subr.mxu0 0.0
    %184 = vmatpush1.msra.mxu0 0.0
    %185 = vmatprep.subr.mxu0 0.0
    %186 = vmatpush1.msra.mxu0 0.0
    %187 = vmatprep.subr.mxu0 0.0
    %188 = vmatpush1.msra.mxu0 0.0
    %189 = vmatprep.subr.mxu0 0.0
    %190 = vmatpush1.msra.mxu0 0.0
    %191 = vmatprep.subr.mxu0 0.0
    %192 = vmatpush1.msra.mxu0 0.0
    %193 = vmatprep.subr.mxu0 0.0
    %194 = vmatpush1.msra.mxu0 0.0
    %195 = vmatprep.subr.mxu0 0.0
    %196 = vmatpush1.msra.mxu0 0.0
    %197 = vmatprep.subr.mxu0 0.0
    %198 = vmatpush1.msra.mxu0 0.0
    %199 = vmatprep.subr.mxu0 0.0
    %200 = vmatpush1.msra.mxu0 0.0
    %201 = vmatprep.subr.mxu0 0.0
    %202 = vmatpush1.msra.mxu0 0.0
    %203 = vmatprep.subr.mxu0 0.0
    %204 = vmatpush1.msra.mxu0 0.0
    %205 = vmatprep.subr.mxu0 0.0
    %206 = vmatpush1.msra.mxu0 0.0
    %207 = vmatprep.subr.mxu0 0.0
    %208 = vmatpush1.msra.mxu0 0.0
    %209 = vmatprep.subr.mxu0 0.0
    %210 = vmatpush1.msra.mxu0 0.0
    %211 = vmatprep.subr.mxu0 0.0
    %212 = vmatpush1.msra.mxu0 0.0
    %213 = vmatprep.subr.mxu0 0.0
    %214 = vmatpush1.msra.mxu0 0.0
    %215 = vmatprep.subr.mxu0 0.0
    %216 = vmatpush1.msra.mxu0 0.0
    %217 = vmatprep.subr.mxu0 0.0
    %218 = vmatpush1.msra.mxu0 0.0
    %219 = vmatprep.subr.mxu0 0.0
    %220 = vmatpush1.msra.mxu0 0.0
    %221 = vmatprep.subr.mxu0 0.0
    %222 = vmatpush1.msra.mxu0 0.0
    %223 = vmatprep.subr.mxu0 0.0
    %224 = vmatpush1.msra.mxu0 0.0
    %225 = vmatprep.subr.mxu0 0.0
    %226 = vmatpush1.msra.mxu0 0.0
    %227 = vmatprep.subr.mxu0 0.0
    %228 = vmatpush1.msra.mxu0 0.0
    %229 = vmatprep.subr.mxu0 0.0
    %230 = vmatpush1.msra.mxu0 0.0
    %231 = vmatprep.subr.mxu0 0.0
    %232 = vmatpush1.msra.mxu0 0.0
    %233 = vmatprep.subr.mxu0 0.0
    %234 = vmatpush1.msra.mxu0 0.0
    %235 = vmatprep.subr.mxu0 0.0
    %236 = vmatpush1.msra.mxu0 0.0
    %237 = vmatprep.mubr.f32.mxu0 0.0
    %v238 = vand.u32 %v65, 4294901760
    %239 = vmatmul.mubr.f32.gmra.mrb[0].mxu0 %v238
    %v240 = vpop.f32.mrb[0].mxu0
    %v241 = vadd.f32 %v145, %v240
    %v242 = vpop.f32.mrb[0].mxu0
    %243 = vmatprep.mubr.f32.mxu0 0.0
    %v244 = vand.u32 %v68, 4294901760
    %245 = vmatmul.mubr.f32.gmra.mrb[0].mxu0 %v244
    %v246 = vpop.f32.mrb[0].mxu0
    %v247 = vadd.f32 %v155, %v246
    %v248 = vpop.f32.mrb[0].mxu0
    %249 = vdwg.mxu0
    %250 = vmatprep.subr.mxu0 0.0
    %v251 = vand.u32 %v46, 4294901760
    %v252 = vsub.f32 %v46, %v251
    %253 = vmatpush1.msra.mxu0 %v252
    %254 = vmatprep.subr.mxu0 0.0
    %v255 = vand.u32 %v47, 4294901760
    %v256 = vsub.f32 %v47, %v255
    %257 = vmatpush1.msra.mxu0 %v256
    %258 = vmatprep.subr.mxu0 0.0
    %v259 = vand.u32 %v48, 4294901760
    %v260 = vsub.f32 %v48, %v259
    %261 = vmatpush1.msra.mxu0 %v260
    %262 = vmatprep.subr.mxu0 0.0
    %263 = vmatpush1.msra.mxu0 0.0
    %264 = vmatprep.subr.mxu0 0.0
    %265 = vmatpush1.msra.mxu0 0.0
    %266 = vmatprep.subr.mxu0 0.0
    %267 = vmatpush1.msra.mxu0 0.0
    %268 = vmatprep.subr.mxu0 0.0
    %269 = vmatpush1.msra.mxu0 0.0
    %270 = vmatprep.subr.mxu0 0.0
    %271 = vmatpush1.msra.mxu0 0.0
    %272 = vmatprep.subr.mxu0 0.0
    %273 = vmatpush1.msra.mxu0 0.0
    %274 = vmatprep.subr.mxu0 0.0
    %275 = vmatpush1.msra.mxu0 0.0
    %276 = vmatprep.subr.mxu0 0.0
    %277 = vmatpush1.msra.mxu0 0.0
    %278 = vmatprep.subr.mxu0 0.0
    %279 = vmatpush1.msra.mxu0 0.0
    %280 = vmatprep.subr.mxu0 0.0
    %281 = vmatpush1.msra.mxu0 0.0
    %282 = vmatprep.subr.mxu0 0.0
    %283 = vmatpush1.msra.mxu0 0.0
    %284 = vmatprep.subr.mxu0 0.0
    %285 = vmatpush1.msra.mxu0 0.0
    %286 = vmatprep.subr.mxu0 0.0
    %287 = vmatpush1.msra.mxu0 0.0
    %288 = vmatprep.subr.mxu0 0.0
    %289 = vmatpush1.msra.mxu0 0.0
    %290 = vmatprep.subr.mxu0 0.0
    %291 = vmatpush1.msra.mxu0 0.0
    %292 = vmatprep.subr.mxu0 0.0
    %293 = vmatpush1.msra.mxu0 0.0
    %294 = vmatprep.subr.mxu0 0.0
    %295 = vmatpush1.msra.mxu0 0.0
    %296 = vmatprep.subr.mxu0 0.0
    %297 = vmatpush1.msra.mxu0 0.0
    %298 = vmatprep.subr.mxu0 0.0
    %299 = vmatpush1.msra.mxu0 0.0
    %300 = vmatprep.subr.mxu0 0.0
    %301 = vmatpush1.msra.mxu0 0.0
    %302 = vmatprep.subr.mxu0 0.0
    %303 = vmatpush1.msra.mxu0 0.0
    %304 = vmatprep.subr.mxu0 0.0
    %305 = vmatpush1.msra.mxu0 0.0
    %306 = vmatprep.subr.mxu0 0.0
    %307 = vmatpush1.msra.mxu0 0.0
    %308 = vmatprep.subr.mxu0 0.0
    %309 = vmatpush1.msra.mxu0 0.0
    %310 = vmatprep.subr.mxu0 0.0
    %311 = vmatpush1.msra.mxu0 0.0
    %312 = vmatprep.subr.mxu0 0.0
    %313 = vmatpush1.msra.mxu0 0.0
    %314 = vmatprep.subr.mxu0 0.0
    %315 = vmatpush1.msra.mxu0 0.0
    %316 = vmatprep.subr.mxu0 0.0
    %317 = vmatpush1.msra.mxu0 0.0
    %318 = vmatprep.subr.mxu0 0.0
    %319 = vmatpush1.msra.mxu0 0.0
    %320 = vmatprep.mubr.f32.mxu0 0.0
    %v321 = vand.u32 %v65, 4294901760
    %v322 = vsub.f32 %v65, %v321
    %323 = vmatmul.mubr.f32.gmra.mrb[0].mxu0 %v322
    %v324 = vpop.f32.mrb[0].mxu0
    %v325 = vadd.f32 %v241, %v324
    %v326 = vpop.f32.mrb[0].mxu0
    %327 = vmatprep.mubr.f32.mxu0 0.0
    %v328 = vand.u32 %v68, 4294901760
    %v329 = vsub.f32 %v68, %v328
    %330 = vmatmul.mubr.f32.gmra.mrb[0].mxu0 %v329
    %v331 = vpop.f32.mrb[0].mxu0
    %v332 = vadd.f32 %v247, %v331
    %v333 = vpop.f32.mrb[0].mxu0
    %334 = vdwg.mxu0
    %335 = vmatprep.subr.mxu0 0.0
    %v336 = vand.u32 %v46, 4294901760
    %337 = vmatpush1.msra.mxu0 %v336
    %338 = vmatprep.subr.mxu0 0.0
    %v339 = vand.u32 %v47, 4294901760
    %340 = vmatpush1.msra.mxu0 %v339
    %341 = vmatprep.subr.mxu0 0.0
    %v342 = vand.u32 %v48, 4294901760
    %343 = vmatpush1.msra.mxu0 %v342
    %344 = vmatprep.subr.mxu0 0.0
    %345 = vmatpush1.msra.mxu0 0.0
    %346 = vmatprep.subr.mxu0 0.0
    %347 = vmatpush1.msra.mxu0 0.0
    %348 = vmatprep.subr.mxu0 0.0
    %349 = vmatpush1.msra.mxu0 0.0
    %350 = vmatprep.subr.mxu0 0.0
    %351 = vmatpush1.msra.mxu0 0.0
    %352 = vmatprep.subr.mxu0 0.0
    %353 = vmatpush1.msra.mxu0 0.0
    %354 = vmatprep.subr.mxu0 0.0
    %355 = vmatpush1.msra.mxu0 0.0
    %356 = vmatprep.subr.mxu0 0.0
    %357 = vmatpush1.msra.mxu0 0.0
    %358 = vmatprep.subr.mxu0 0.0
    %359 = vmatpush1.msra.mxu0 0.0
    %360 = vmatprep.subr.mxu0 0.0
    %361 = vmatpush1.msra.mxu0 0.0
    %362 = vmatprep.subr.mxu0 0.0
    %363 = vmatpush1.msra.mxu0 0.0
    %364 = vmatprep.subr.mxu0 0.0
    %365 = vmatpush1.msra.mxu0 0.0
    %366 = vmatprep.subr.mxu0 0.0
    %367 = vmatpush1.msra.mxu0 0.0
    %368 = vmatprep.subr.mxu0 0.0
    %369 = vmatpush1.msra.mxu0 0.0
    %370 = vmatprep.subr.mxu0 0.0
    %371 = vmatpush1.msra.mxu0 0.0
    %372 = vmatprep.subr.mxu0 0.0
    %373 = vmatpush1.msra.mxu0 0.0
    %374 = vmatprep.subr.mxu0 0.0
    %375 = vmatpush1.msra.mxu0 0.0
    %376 = vmatprep.subr.mxu0 0.0
    %377 = vmatpush1.msra.mxu0 0.0
    %378 = vmatprep.subr.mxu0 0.0
    %379 = vmatpush1.msra.mxu0 0.0
    %380 = vmatprep.subr.mxu0 0.0
    %381 = vmatpush1.msra.mxu0 0.0
    %382 = vmatprep.subr.mxu0 0.0
    %383 = vmatpush1.msra.mxu0 0.0
    %384 = vmatprep.subr.mxu0 0.0
    %385 = vmatpush1.msra.mxu0 0.0
    %386 = vmatprep.subr.mxu0 0.0
    %387 = vmatpush1.msra.mxu0 0.0
    %388 = vmatprep.subr.mxu0 0.0
    %389 = vmatpush1.msra.mxu0 0.0
    %390 = vmatprep.subr.mxu0 0.0
    %391 = vmatpush1.msra.mxu0 0.0
    %392 = vmatprep.subr.mxu0 0.0
    %393 = vmatpush1.msra.mxu0 0.0
    %394 = vmatprep.subr.mxu0 0.0
    %395 = vmatpush1.msra.mxu0 0.0
    %396 = vmatprep.subr.mxu0 0.0
    %397 = vmatpush1.msra.mxu0 0.0
    %398 = vmatprep.subr.mxu0 0.0
    %399 = vmatpush1.msra.mxu0 0.0
    %400 = vmatprep.subr.mxu0 0.0
    %401 = vmatpush1.msra.mxu0 0.0
    %402 = vmatprep.mubr.f32.mxu0 0.0
    %v403 = vand.u32 %v65, 4294901760
    %v404 = vsub.f32 %v65, %v403
    %v405 = vand.u32 %v404, 4294901760
    %406 = vmatmul.mubr.f32.gmra.mrb[0].mxu0 %v405
    %v407 = vpop.f32.mrb[0].mxu0
    %v408 = vadd.f32 %v325, %v407
    %v409 = vpop.f32.mrb[0].mxu0
    %410 = vmatprep.mubr.f32.mxu0 0.0
    %v411 = vand.u32 %v68, 4294901760
    %v412 = vsub.f32 %v68, %v411
    %v413 = vand.u32 %v412, 4294901760
    %414 = vmatmul.mubr.f32.gmra.mrb[0].mxu0 %v413
    %v415 = vpop.f32.mrb[0].mxu0
    %v416 = vadd.f32 %v332, %v415
    %v417 = vpop.f32.mrb[0].mxu0
    %418 = vdwg.mxu0
    %419 = vmatprep.subr.mxu0 0.0
    %v420 = vand.u32 %v46, 4294901760
    %v421 = vsub.f32 %v46, %v420
    %v422 = vand.u32 %v421, 4294901760
    %423 = vmatpush1.msra.mxu0 %v422
    %424 = vmatprep.subr.mxu0 0.0
    %v425 = vand.u32 %v47, 4294901760
    %v426 = vsub.f32 %v47, %v425
    %v427 = vand.u32 %v426, 4294901760
    %428 = vmatpush1.msra.mxu0 %v427
    %429 = vmatprep.subr.mxu0 0.0
    %v430 = vand.u32 %v48, 4294901760
    %v431 = vsub.f32 %v48, %v430
    %v432 = vand.u32 %v431, 4294901760
    %433 = vmatpush1.msra.mxu0 %v432
    %434 = vmatprep.subr.mxu0 0.0
    %435 = vmatpush1.msra.mxu0 0.0
    %436 = vmatprep.subr.mxu0 0.0
    %437 = vmatpush1.msra.mxu0 0.0
    %438 = vmatprep.subr.mxu0 0.0
    %439 = vmatpush1.msra.mxu0 0.0
    %440 = vmatprep.subr.mxu0 0.0
    %441 = vmatpush1.msra.mxu0 0.0
    %442 = vmatprep.subr.mxu0 0.0
    %443 = vmatpush1.msra.mxu0 0.0
    %444 = vmatprep.subr.mxu0 0.0
    %445 = vmatpush1.msra.mxu0 0.0
    %446 = vmatprep.subr.mxu0 0.0
    %447 = vmatpush1.msra.mxu0 0.0
    %448 = vmatprep.subr.mxu0 0.0
    %449 = vmatpush1.msra.mxu0 0.0
    %450 = vmatprep.subr.mxu0 0.0
    %451 = vmatpush1.msra.mxu0 0.0
    %452 = vmatprep.subr.mxu0 0.0
    %453 = vmatpush1.msra.mxu0 0.0
    %454 = vmatprep.subr.mxu0 0.0
    %455 = vmatpush1.msra.mxu0 0.0
    %456 = vmatprep.subr.mxu0 0.0
    %457 = vmatpush1.msra.mxu0 0.0
    %458 = vmatprep.subr.mxu0 0.0
    %459 = vmatpush1.msra.mxu0 0.0
    %460 = vmatprep.subr.mxu0 0.0
    %461 = vmatpush1.msra.mxu0 0.0
    %462 = vmatprep.subr.mxu0 0.0
    %463 = vmatpush1.msra.mxu0 0.0
    %464 = vmatprep.subr.mxu0 0.0
    %465 = vmatpush1.msra.mxu0 0.0
    %466 = vmatprep.subr.mxu0 0.0
    %467 = vmatpush1.msra.mxu0 0.0
    %468 = vmatprep.subr.mxu0 0.0
    %469 = vmatpush1.msra.mxu0 0.0
    %470 = vmatprep.subr.mxu0 0.0
    %471 = vmatpush1.msra.mxu0 0.0
    %472 = vmatprep.subr.mxu0 0.0
    %473 = vmatpush1.msra.mxu0 0.0
    %474 = vmatprep.subr.mxu0 0.0
    %475 = vmatpush1.msra.mxu0 0.0
    %476 = vmatprep.subr.mxu0 0.0
    %477 = vmatpush1.msra.mxu0 0.0
    %478 = vmatprep.subr.mxu0 0.0
    %479 = vmatpush1.msra.mxu0 0.0
    %480 = vmatprep.subr.mxu0 0.0
    %481 = vmatpush1.msra.mxu0 0.0
    %482 = vmatprep.subr.mxu0 0.0
    %483 = vmatpush1.msra.mxu0 0.0
    %484 = vmatprep.subr.mxu0 0.0
    %485 = vmatpush1.msra.mxu0 0.0
    %486 = vmatprep.subr.mxu0 0.0
    %487 = vmatpush1.msra.mxu0 0.0
    %488 = vmatprep.subr.mxu0 0.0
    %489 = vmatpush1.msra.mxu0 0.0
    %490 = vmatprep.subr.mxu0 0.0
    %491 = vmatpush1.msra.mxu0 0.0
    %492 = vmatprep.mubr.f32.mxu0 0.0
    %v493 = vand.u32 %v65, 4294901760
    %494 = vmatmul.mubr.f32.gmra.mrb[0].mxu0 %v493
    %v495 = vpop.f32.mrb[0].mxu0
    %v496 = vadd.f32 %v408, %v495
    %v497 = vpop.f32.mrb[0].mxu0
    %498 = vmatprep.mubr.f32.mxu0 0.0
    %v499 = vand.u32 %v68, 4294901760
    %500 = vmatmul.mubr.f32.gmra.mrb[0].mxu0 %v499
    %v501 = vpop.f32.mrb[0].mxu0
    %v502 = vadd.f32 %v416, %v501
    %v503 = vpop.f32.mrb[0].mxu0
    %504 = vdwg.mxu0
    %505 = vmatprep.subr.mxu0 0.0
    %v506 = vand.u32 %v46, 4294901760
    %507 = vmatpush1.msra.mxu0 %v506
    %508 = vmatprep.subr.mxu0 0.0
    %v509 = vand.u32 %v47, 4294901760
    %510 = vmatpush1.msra.mxu0 %v509
    %511 = vmatprep.subr.mxu0 0.0
    %v512 = vand.u32 %v48, 4294901760
    %513 = vmatpush1.msra.mxu0 %v512
    %514 = vmatprep.subr.mxu0 0.0
    %515 = vmatpush1.msra.mxu0 0.0
    %516 = vmatprep.subr.mxu0 0.0
    %517 = vmatpush1.msra.mxu0 0.0
    %518 = vmatprep.subr.mxu0 0.0
    %519 = vmatpush1.msra.mxu0 0.0
    %520 = vmatprep.subr.mxu0 0.0
    %521 = vmatpush1.msra.mxu0 0.0
    %522 = vmatprep.subr.mxu0 0.0
    %523 = vmatpush1.msra.mxu0 0.0
    %524 = vmatprep.subr.mxu0 0.0
    %525 = vmatpush1.msra.mxu0 0.0
    %526 = vmatprep.subr.mxu0 0.0
    %527 = vmatpush1.msra.mxu0 0.0
    %528 = vmatprep.subr.mxu0 0.0
    %529 = vmatpush1.msra.mxu0 0.0
    %530 = vmatprep.subr.mxu0 0.0
    %531 = vmatpush1.msra.mxu0 0.0
    %532 = vmatprep.subr.mxu0 0.0
    %533 = vmatpush1.msra.mxu0 0.0
    %534 = vmatprep.subr.mxu0 0.0
    %535 = vmatpush1.msra.mxu0 0.0
    %536 = vmatprep.subr.mxu0 0.0
    %537 = vmatpush1.msra.mxu0 0.0
    %538 = vmatprep.subr.mxu0 0.0
    %539 = vmatpush1.msra.mxu0 0.0
    %540 = vmatprep.subr.mxu0 0.0
    %541 = vmatpush1.msra.mxu0 0.0
    %542 = vmatprep.subr.mxu0 0.0
    %543 = vmatpush1.msra.mxu0 0.0
    %544 = vmatprep.subr.mxu0 0.0
    %545 = vmatpush1.msra.mxu0 0.0
    %546 = vmatprep.subr.mxu0 0.0
    %547 = vmatpush1.msra.mxu0 0.0
    %548 = vmatprep.subr.mxu0 0.0
    %549 = vmatpush1.msra.mxu0 0.0
    %550 = vmatprep.subr.mxu0 0.0
    %551 = vmatpush1.msra.mxu0 0.0
    %552 = vmatprep.subr.mxu0 0.0
    %553 = vmatpush1.msra.mxu0 0.0
    %554 = vmatprep.subr.mxu0 0.0
    %555 = vmatpush1.msra.mxu0 0.0
    %556 = vmatprep.subr.mxu0 0.0
    %557 = vmatpush1.msra.mxu0 0.0
    %558 = vmatprep.subr.mxu0 0.0
    %559 = vmatpush1.msra.mxu0 0.0
    %560 = vmatprep.subr.mxu0 0.0
    %561 = vmatpush1.msra.mxu0 0.0
    %562 = vmatprep.subr.mxu0 0.0
    %563 = vmatpush1.msra.mxu0 0.0
    %564 = vmatprep.subr.mxu0 0.0
    %565 = vmatpush1.msra.mxu0 0.0
    %566 = vmatprep.subr.mxu0 0.0
    %567 = vmatpush1.msra.mxu0 0.0
    %568 = vmatprep.subr.mxu0 0.0
    %569 = vmatpush1.msra.mxu0 0.0
    %570 = vmatprep.subr.mxu0 0.0
    %571 = vmatpush1.msra.mxu0 0.0
    %572 = vmatprep.mubr.f32.mxu0 0.0
    %v573 = vand.u32 %v65, 4294901760
    %574 = vmatmul.mubr.f32.gmra.mrb[0].mxu0 %v573
    %v575 = vpop.f32.mrb[0].mxu0
    %v576 = vadd.f32 %v496, %v575
    %v577 = vpop.f32.mrb[0].mxu0
    %578 = vmatprep.mubr.f32.mxu0 0.0
    %v579 = vand.u32 %v68, 4294901760
    %580 = vmatmul.mubr.f32.gmra.mrb[0].mxu0 %v579
    %v581 = vpop.f32.mrb[0].mxu0
    %v582 = vadd.f32 %v502, %v581
    %v583 = vpop.f32.mrb[0].mxu0
    %584 = vdwg.mxu0
    %585 = vst [vmem:[#allocation5] sm:$0xff] %v576
    %586 = vst [vmem:[#allocation5 + $0x8] sm:$0xff] %v582
    // Predicated region
    $region18: #{tpu_custom_call.1} parent=1 // pred_check
      _
    $region19: #{tpu_custom_call.1} parent=1 // pred_check_branch
      %588 = sbr.rel (0) target = $region21
    $region20: #{tpu_custom_call.1} parent=1 // pred_region
      %s590 = ssub.s32 256, 256
      %591 = vsyncadd [#allocation4], %s590
      %s592 = sshll.u32 [#allocation5], 4
      %s593 = int_to_ptr.vmem [resolvable:$true] %s592
      %598 = dma.vmem_to_hbm [thread:$0]  %s593, 256, %s3, [#allocation4], 128, 128, 8
    $region21: #{tpu_custom_call.1} parent=1 // pred_fallthru
      _
    // Predicated region
    $region22: #{tpu_custom_call.1} parent=1 // pred_check
      _
    $region23: #{tpu_custom_call.1} parent=1 // pred_check_branch
      %600 = sbr.rel (0) target = $region25
    $region24: #{tpu_custom_call.1} parent=1 // pred_region
      %601 = dma.done [#allocation4], 256
    $region25: #{tpu_custom_call.1} parent=1 // pred_fallthru
      _
    %602 = vsyncpa [#allocation3], 1
    %603 = vsyncpa [#allocation4], 1

</llo_original>
